<compile_context>
chip_gen: v5e
topology: v5e:2x2
jax: 0.10.0
libtpu: 0.0.40
codegen_flags: <defaults>
</compile_context>

<pallas_src>
import functools

import jax
import jax.numpy as jnp
from jax.experimental import pallas as pl
from jax.experimental.pallas import tpu as pltpu


def _round_up(n, m):
    return ((n + m - 1) // m) * m


def _attention_kernel(x_q_ref, x_kv_ref, wq_ref, bq_ref, wkv_ref, bkv_ref,
                      wo_ref, bo_ref, out_ref,
                      q_scr, m_scr, l_scr, acc_scr, *, scale, h_pad):
    ki = pl.program_id(1)

    @pl.when(ki == 0)
    def _init():
        # Q projection once per query row block (bf16 operands, f32 accum).
        q = jnp.dot(x_q_ref[...], wq_ref[...],
                    preferred_element_type=jnp.float32) + bq_ref[...]
        q_scr[...] = q.astype(jnp.bfloat16)
        m_scr[...] = jnp.full(m_scr.shape, -jnp.inf, dtype=m_scr.dtype)
        l_scr[...] = jnp.zeros(l_scr.shape, dtype=l_scr.dtype)
        acc_scr[...] = jnp.zeros(acc_scr.shape, dtype=acc_scr.dtype)

    # Fused K/V projection for this K/V block: one matmul + one bias add.
    kv = jnp.dot(x_kv_ref[...], wkv_ref[...],
                 preferred_element_type=jnp.float32) + bkv_ref[...]
    k = kv[:, :h_pad].astype(jnp.bfloat16)
    v = kv[:, h_pad:].astype(jnp.bfloat16)

    # scores = q @ k^T without materializing k^T (contract hidden dim of both).
    s = jax.lax.dot_general(q_scr[...], k, (((1,), (1,)), ((), ())),
                            preferred_element_type=jnp.float32) * scale

    # Online (flash-style) softmax update, all in f32.
    m_prev = m_scr[...]
    m_new = jnp.maximum(m_prev, jnp.max(s, axis=-1, keepdims=True))
    alpha = jnp.exp(m_prev - m_new)
    p = jnp.exp(s - m_new)
    l_scr[...] = alpha * l_scr[...] + jnp.sum(p, axis=-1, keepdims=True)
    acc_scr[...] = alpha * acc_scr[...] + jnp.dot(
        p.astype(jnp.bfloat16), v, preferred_element_type=jnp.float32)
    m_scr[...] = m_new

    @pl.when(ki == pl.num_programs(1) - 1)
    def _finish():
        attended = acc_scr[...] * pl.reciprocal(l_scr[...], approx=True)
        out = jnp.dot(attended.astype(jnp.bfloat16), wo_ref[...],
                      preferred_element_type=jnp.float32) + bo_ref[...]
        out_ref[...] = out.astype(out_ref.dtype)


def attention_forward(x, params, *, block_q=256, block_kv=256):
    """x: [seq, input_size] f32; params: pre-transposed weights, (1, h) biases."""
    s, d_in = x.shape
    h = params["wq"].shape[1]
    h_pad = _round_up(h, 128)
    d_pad = _round_up(d_in, 128)

    tq = min(block_q, s)
    tk = min(block_kv, s)
    assert s % tq == 0 and s % tk == 0, "seq must divide evenly into row blocks"

    def pad_cols(a, n):
        pad = n - a.shape[1]
        return a if pad == 0 else jnp.pad(a, ((0, 0), (0, pad)))

    def pad_rows(a, n):
        pad = n - a.shape[0]
        return a if pad == 0 else jnp.pad(a, ((0, pad), (0, 0)))

    # Lane-dense (multiple-of-128) padding everywhere; MXU operands in bf16.
    # Zero-padded input columns x zero-padded weight rows contribute nothing.
    x_p = pad_cols(x, d_pad).astype(jnp.bfloat16)
    wq = pad_rows(pad_cols(params["wq"], h_pad), d_pad).astype(jnp.bfloat16)
    bq = pad_cols(params["bq"], h_pad)
    wkv = pad_rows(
        jnp.concatenate([pad_cols(params["wk"], h_pad),
                         pad_cols(params["wv"], h_pad)], axis=1),
        d_pad).astype(jnp.bfloat16)
    bkv = jnp.concatenate([pad_cols(params["bk"], h_pad),
                           pad_cols(params["bv"], h_pad)], axis=1)
    wo = pad_rows(pad_cols(params["wo"], h_pad), h_pad).astype(jnp.bfloat16)
    bo = pad_cols(params["bo"], h_pad)

    scale = 1.0 / (h ** 0.5)  # PyTorch divides by k.size(-1)**0.5 == hidden_size
    kernel = functools.partial(_attention_kernel, scale=scale, h_pad=h_pad)

    const = lambda shape: pl.BlockSpec(shape, lambda qi, ki: (0, 0))

    out_padded = pl.pallas_call(
        kernel,
        out_shape=jax.ShapeDtypeStruct((s, h_pad), x.dtype),
        grid_spec=pltpu.PrefetchScalarGridSpec(
            num_scalar_prefetch=0,
            grid=(s // tq, s // tk),
            in_specs=[
                pl.BlockSpec((tq, d_pad), lambda qi, ki: (qi, 0)),  # x rows -> Q
                pl.BlockSpec((tk, d_pad), lambda qi, ki: (ki, 0)),  # x rows -> K/V
                const((d_pad, h_pad)),       # Wq (padded)
                const((1, h_pad)),           # bq
                const((d_pad, 2 * h_pad)),   # [Wk | Wv] fused
                const((1, 2 * h_pad)),       # [bk | bv] fused
                const((h_pad, h_pad)),       # Wo (padded)
                const((1, h_pad)),           # bo
            ],
            out_specs=pl.BlockSpec((tq, h_pad), lambda qi, ki: (qi, 0)),
            scratch_shapes=[
                pltpu.VMEM((tq, h_pad), jnp.bfloat16),  # q block
                pltpu.VMEM((tq, 1), jnp.float32),       # running max
                pltpu.VMEM((tq, 1), jnp.float32),       # running denom
                pltpu.VMEM((tq, h_pad), jnp.float32),   # output accumulator
            ],
        ),
        compiler_params=pltpu.CompilerParams(
            dimension_semantics=("parallel", "arbitrary")),
    )(x_p, x_p, wq, bq, wkv, bkv, wo, bo)

    # Drop the lane-padding back to the module's hidden size.
    return out_padded[:, :h]


def init_params(key, input_size, hidden_size):
    """Deterministic init mimicking nn.Linear's uniform(-1/sqrt(fan_in), +)."""
    ks = jax.random.split(key, 8)

    def linear(kw, kb, fan_in, fan_out):
        bound = 1.0 / (fan_in ** 0.5)
        # stored pre-transposed: [fan_in, fan_out]
        w = jax.random.uniform(kw, (fan_in, fan_out), jnp.float32, -bound, bound)
        b = jax.random.uniform(kb, (1, fan_out), jnp.float32, -bound, bound)
        return w, b

    wq, bq = linear(ks[0], ks[1], input_size, hidden_size)
    wk, bk = linear(ks[2], ks[3], input_size, hidden_size)
    wv, bv = linear(ks[4], ks[5], input_size, hidden_size)
    wo, bo = linear(ks[6], ks[7], hidden_size, hidden_size)
    return dict(wq=wq, bq=bq, wk=wk, bk=bk, wv=wv, bv=bv, wo=wo, bo=bo)


def reference_forward(x, p):
    q = x @ p["wq"] + p["bq"]
    k = x @ p["wk"] + p["bk"]
    v = x @ p["wv"] + p["bv"]
    scores = (q @ k.T) / (k.shape[-1] ** 0.5)
    w = jax.nn.softmax(scores, axis=-1)
    return (w @ v) @ p["wo"] + p["bo"]


if __name__ == "__main__":
    key = jax.random.PRNGKey(0)
    kx, kp, kx2 = jax.random.split(key, 3)

    seq, input_size, hidden_size = 8, 32, 32
    x = jax.random.normal(kx, (seq, input_size), jnp.float32)
    params = init_params(kp, input_size, hidden_size)

    out = jax.block_until_ready(attention_forward(x, params))
    ref = reference_forward(x, params)
    assert out.shape == (seq, hidden_size)
    # bf16 MXU operands (f32 accumulation) -> compare with a bf16-level tolerance.
    assert jnp.allclose(out, ref, atol=3e-2, rtol=3e-2), \
        float(jnp.max(jnp.abs(out - ref)))

    # Larger shape exercising the multi-block online softmax + parallel grid axis.
    seq2 = 512
    x2 = jax.random.normal(kx2, (seq2, input_size), jnp.float32)
    out2 = jax.block_until_ready(
        attention_forward(x2, params, block_q=256, block_kv=256))
    ref2 = reference_forward(x2, params)
    assert out2.shape == (seq2, hidden_size)
    assert jnp.allclose(out2, ref2, atol=3e-2, rtol=3e-2), \
        float(jnp.max(jnp.abs(out2 - ref2)))

    print("KERNEL_OK")
</pallas_src>

<mosaic_0001>
module attributes {stable_mosaic.version = 11 : i64} {
  func.func @_attention_kernel(%arg0: i32, %arg1: i32, %arg2: memref<8x128xbf16, #tpu.memory_space<vmem>>, %arg3: memref<8x128xbf16, #tpu.memory_space<vmem>>, %arg4: memref<128x128xbf16, #tpu.memory_space<vmem>>, %arg5: memref<1x128xf32, #tpu.memory_space<vmem>>, %arg6: memref<128x256xbf16, #tpu.memory_space<vmem>>, %arg7: memref<1x256xf32, #tpu.memory_space<vmem>>, %arg8: memref<128x128xbf16, #tpu.memory_space<vmem>>, %arg9: memref<1x128xf32, #tpu.memory_space<vmem>>, %arg10: memref<8x128xf32, #tpu.memory_space<vmem>>, %arg11: memref<8x128xbf16, #tpu.memory_space<vmem>>, %arg12: memref<8x1xf32, #tpu.memory_space<vmem>>, %arg13: memref<8x1xf32, #tpu.memory_space<vmem>>, %arg14: memref<8x128xf32, #tpu.memory_space<vmem>>) attributes {dimension_semantics = [#tpu.dimension_semantics<parallel>, #tpu.dimension_semantics<arbitrary>], iteration_bounds = array<i64: 1, 1>, scalar_prefetch = 0 : i64, scratch_operands = 4 : i64, tpu.core_type = #tpu.core_type<tc>, window_params = [{transform_indices = @transform_0, window_bounds = array<i64: 8, 128>}, {transform_indices = @transform_1, window_bounds = array<i64: 8, 128>}, {pipeline_mode = #tpu.pipeline_mode<synchronous>, transform_indices = @transform_2, window_bounds = array<i64: 128, 128>}, {pipeline_mode = #tpu.pipeline_mode<synchronous>, transform_indices = @transform_3, window_bounds = array<i64: 1, 128>}, {pipeline_mode = #tpu.pipeline_mode<synchronous>, transform_indices = @transform_4, window_bounds = array<i64: 128, 256>}, {pipeline_mode = #tpu.pipeline_mode<synchronous>, transform_indices = @transform_5, window_bounds = array<i64: 1, 256>}, {pipeline_mode = #tpu.pipeline_mode<synchronous>, transform_indices = @transform_6, window_bounds = array<i64: 128, 128>}, {pipeline_mode = #tpu.pipeline_mode<synchronous>, transform_indices = @transform_7, window_bounds = array<i64: 1, 128>}, {transform_indices = @transform_8, window_bounds = array<i64: 8, 128>}]} {
    %c0_i32 = arith.constant 0 : i32
    %0 = arith.cmpi eq, %arg1, %c0_i32 : i32
    %1 = arith.extui %0 : i1 to i32
    %c0_i32_0 = arith.constant 0 : i32
    %2 = arith.cmpi ne, %1, %c0_i32_0 : i32
    scf.if %2 {
      %c0_27 = arith.constant 0 : index
      %c0_28 = arith.constant 0 : index
      %43 = vector.load %arg2[%c0_27, %c0_28] : memref<8x128xbf16, #tpu.memory_space<vmem>>, vector<8x128xbf16>
      %c0_29 = arith.constant 0 : index
      %c0_30 = arith.constant 0 : index
      %44 = vector.load %arg4[%c0_29, %c0_30] : memref<128x128xbf16, #tpu.memory_space<vmem>>, vector<128x128xbf16>
      %cst_31 = arith.constant dense<0.000000e+00> : vector<8x128xf32>
      %45 = tpu.matmul %43, %44, %cst_31 {dimension_numbers = #tpu.dot_dimension_numbers<[1], [0], [0], [1], [0, 0, 1, 1], [], []>} : vector<8x128xbf16>, vector<128x128xbf16>, vector<8x128xf32> -> vector<8x128xf32>
      %c0_32 = arith.constant 0 : index
      %c0_33 = arith.constant 0 : index
      %46 = vector.load %arg5[%c0_32, %c0_33] : memref<1x128xf32, #tpu.memory_space<vmem>>, vector<1x128xf32>
      %47 = vector.broadcast %46 : vector<1x128xf32> to vector<8x128xf32>
      %48 = arith.addf %45, %47 : vector<8x128xf32>
      %49 = arith.truncf %48 : vector<8x128xf32> to vector<8x128xbf16>
      %c0_34 = arith.constant 0 : index
      %c0_35 = arith.constant 0 : index
      %50 = vector.load %arg11[%c0_34, %c0_35] : memref<8x128xbf16, #tpu.memory_space<vmem>>, vector<8x128xbf16>
      tpu.vector_store %arg11[%c0_34, %c0_35], %49 {strides = array<i32>} : memref<8x128xbf16, #tpu.memory_space<vmem>>, vector<8x128xbf16>,
      %cst_36 = arith.constant 0xFF800000 : f32
      %51 = vector.broadcast %cst_36 : f32 to vector<8x1xf32>
      %c0_37 = arith.constant 0 : index
      %c0_38 = arith.constant 0 : index
      %52 = vector.load %arg12[%c0_37, %c0_38] : memref<8x1xf32, #tpu.memory_space<vmem>>, vector<8x1xf32>
      tpu.vector_store %arg12[%c0_37, %c0_38], %51 {strides = array<i32>} : memref<8x1xf32, #tpu.memory_space<vmem>>, vector<8x1xf32>,
      %cst_39 = arith.constant 0.000000e+00 : f32
      %53 = vector.broadcast %cst_39 : f32 to vector<8x1xf32>
      %c0_40 = arith.constant 0 : index
      %c0_41 = arith.constant 0 : index
      %54 = vector.load %arg13[%c0_40, %c0_41] : memref<8x1xf32, #tpu.memory_space<vmem>>, vector<8x1xf32>
      tpu.vector_store %arg13[%c0_40, %c0_41], %53 {strides = array<i32>} : memref<8x1xf32, #tpu.memory_space<vmem>>, vector<8x1xf32>,
      %cst_42 = arith.constant 0.000000e+00 : f32
      %55 = vector.broadcast %cst_42 : f32 to vector<8x128xf32>
      %c0_43 = arith.constant 0 : index
      %c0_44 = arith.constant 0 : index
      %56 = vector.load %arg14[%c0_43, %c0_44] : memref<8x128xf32, #tpu.memory_space<vmem>>, vector<8x128xf32>
      tpu.vector_store %arg14[%c0_43, %c0_44], %55 {strides = array<i32>} : memref<8x128xf32, #tpu.memory_space<vmem>>, vector<8x128xf32>,
    } else {
    }
    %c0 = arith.constant 0 : index
    %c0_1 = arith.constant 0 : index
    %3 = vector.load %arg3[%c0, %c0_1] : memref<8x128xbf16, #tpu.memory_space<vmem>>, vector<8x128xbf16>
    %c0_2 = arith.constant 0 : index
    %c0_3 = arith.constant 0 : index
    %4 = vector.load %arg6[%c0_2, %c0_3] : memref<128x256xbf16, #tpu.memory_space<vmem>>, vector<128x256xbf16>
    %cst = arith.constant dense<0.000000e+00> : vector<8x256xf32>
    %5 = tpu.matmul %3, %4, %cst {dimension_numbers = #tpu.dot_dimension_numbers<[1], [0], [0], [1], [0, 0, 1, 1], [], []>} : vector<8x128xbf16>, vector<128x256xbf16>, vector<8x256xf32> -> vector<8x256xf32>
    %c0_4 = arith.constant 0 : index
    %c0_5 = arith.constant 0 : index
    %6 = vector.load %arg7[%c0_4, %c0_5] : memref<1x256xf32, #tpu.memory_space<vmem>>, vector<1x256xf32>
    %7 = vector.broadcast %6 : vector<1x256xf32> to vector<8x256xf32>
    %8 = arith.addf %5, %7 : vector<8x256xf32>
    %9 = vector.extract_strided_slice %8 {offsets = [0, 0], sizes = [8, 128], strides = [1, 1]} : vector<8x256xf32> to vector<8x128xf32>
    %10 = arith.truncf %9 : vector<8x128xf32> to vector<8x128xbf16>
    %11 = vector.extract_strided_slice %8 {offsets = [0, 128], sizes = [8, 128], strides = [1, 1]} : vector<8x256xf32> to vector<8x128xf32>
    %12 = arith.truncf %11 : vector<8x128xf32> to vector<8x128xbf16>
    %c0_6 = arith.constant 0 : index
    %c0_7 = arith.constant 0 : index
    %13 = vector.load %arg11[%c0_6, %c0_7] : memref<8x128xbf16, #tpu.memory_space<vmem>>, vector<8x128xbf16>
    %cst_8 = arith.constant dense<0.000000e+00> : vector<8x8xf32>
    %14 = tpu.matmul %13, %10, %cst_8 {dimension_numbers = #tpu.dot_dimension_numbers<[1], [1], [0], [0], [0, 0, 1, 0], [], []>} : vector<8x128xbf16>, vector<8x128xbf16>, vector<8x8xf32> -> vector<8x8xf32>
    %cst_9 = arith.constant 0.176776692 : f32
    %15 = vector.broadcast %cst_9 : f32 to vector<8x8xf32>
    %16 = arith.mulf %14, %15 : vector<8x8xf32>
    %c0_10 = arith.constant 0 : index
    %c0_11 = arith.constant 0 : index
    %17 = vector.load %arg12[%c0_10, %c0_11] : memref<8x1xf32, #tpu.memory_space<vmem>>, vector<8x1xf32>
    %cst_12 = arith.constant dense<0xFF800000> : vector<8xf32>
    %18 = vector.multi_reduction <maximumf>, %16, %cst_12 [1] : vector<8x8xf32> to vector<8xf32>
    %19 = vector.shape_cast %18 : vector<8xf32> to vector<8x1xf32>
    %20 = arith.maximumf %17, %19 : vector<8x1xf32>
    %21 = arith.subf %17, %20 : vector<8x1xf32>
    %22 = math.exp %21 : vector<8x1xf32>
    %23 = vector.broadcast %20 : vector<8x1xf32> to vector<8x8xf32>
    %24 = arith.subf %16, %23 : vector<8x8xf32>
    %25 = math.exp %24 : vector<8x8xf32>
    %c0_13 = arith.constant 0 : index
    %c0_14 = arith.constant 0 : index
    %26 = vector.load %arg13[%c0_13, %c0_14] : memref<8x1xf32, #tpu.memory_space<vmem>>, vector<8x1xf32>
    %27 = arith.mulf %22, %26 : vector<8x1xf32>
    %cst_15 = arith.constant dense<0.000000e+00> : vector<8xf32>
    %28 = vector.multi_reduction <add>, %25, %cst_15 [1] : vector<8x8xf32> to vector<8xf32>
    %29 = vector.shape_cast %28 : vector<8xf32> to vector<8x1xf32>
    %30 = arith.addf %27, %29 : vector<8x1xf32>
    %c0_16 = arith.constant 0 : index
    %c0_17 = arith.constant 0 : index
    %31 = vector.load %arg13[%c0_16, %c0_17] : memref<8x1xf32, #tpu.memory_space<vmem>>, vector<8x1xf32>
    tpu.vector_store %arg13[%c0_16, %c0_17], %30 {strides = array<i32>} : memref<8x1xf32, #tpu.memory_space<vmem>>, vector<8x1xf32>,
    %c0_18 = arith.constant 0 : index
    %c0_19 = arith.constant 0 : index
    %32 = vector.load %arg14[%c0_18, %c0_19] : memref<8x128xf32, #tpu.memory_space<vmem>>, vector<8x128xf32>
    %33 = vector.broadcast %22 : vector<8x1xf32> to vector<8x128xf32>
    %34 = arith.mulf %33, %32 : vector<8x128xf32>
    %35 = arith.truncf %25 : vector<8x8xf32> to vector<8x8xbf16>
    %cst_20 = arith.constant dense<0.000000e+00> : vector<8x128xf32>
    %36 = tpu.matmul %35, %12, %cst_20 {dimension_numbers = #tpu.dot_dimension_numbers<[1], [0], [0], [1], [0, 0, 1, 1], [], []>} : vector<8x8xbf16>, vector<8x128xbf16>, vector<8x128xf32> -> vector<8x128xf32>
    %37 = arith.addf %34, %36 : vector<8x128xf32>
    %c0_21 = arith.constant 0 : index
    %c0_22 = arith.constant 0 : index
    %38 = vector.load %arg14[%c0_21, %c0_22] : memref<8x128xf32, #tpu.memory_space<vmem>>, vector<8x128xf32>
    tpu.vector_store %arg14[%c0_21, %c0_22], %37 {strides = array<i32>} : memref<8x128xf32, #tpu.memory_space<vmem>>, vector<8x128xf32>,
    %c0_23 = arith.constant 0 : index
    %c0_24 = arith.constant 0 : index
    %39 = vector.load %arg12[%c0_23, %c0_24] : memref<8x1xf32, #tpu.memory_space<vmem>>, vector<8x1xf32>
    tpu.vector_store %arg12[%c0_23, %c0_24], %20 {strides = array<i32>} : memref<8x1xf32, #tpu.memory_space<vmem>>, vector<8x1xf32>,
    %c0_i32_25 = arith.constant 0 : i32
    %40 = arith.cmpi eq, %arg1, %c0_i32_25 : i32
    %41 = arith.extui %40 : i1 to i32
    %c0_i32_26 = arith.constant 0 : i32
    %42 = arith.cmpi ne, %41, %c0_i32_26 : i32
    scf.if %42 {
      %c0_27 = arith.constant 0 : index
      %c0_28 = arith.constant 0 : index
      %43 = vector.load %arg14[%c0_27, %c0_28] : memref<8x128xf32, #tpu.memory_space<vmem>>, vector<8x128xf32>
      %c0_29 = arith.constant 0 : index
      %c0_30 = arith.constant 0 : index
      %44 = vector.load %arg13[%c0_29, %c0_30] : memref<8x1xf32, #tpu.memory_space<vmem>>, vector<8x1xf32>
      %45 = tpu.reciprocal %44 {approx = true} : vector<8x1xf32> -> vector<8x1xf32>
      %46 = vector.broadcast %45 : vector<8x1xf32> to vector<8x128xf32>
      %47 = arith.mulf %43, %46 : vector<8x128xf32>
      %48 = arith.truncf %47 : vector<8x128xf32> to vector<8x128xbf16>
      %c0_31 = arith.constant 0 : index
      %c0_32 = arith.constant 0 : index
      %49 = vector.load %arg8[%c0_31, %c0_32] : memref<128x128xbf16, #tpu.memory_space<vmem>>, vector<128x128xbf16>
      %cst_33 = arith.constant dense<0.000000e+00> : vector<8x128xf32>
      %50 = tpu.matmul %48, %49, %cst_33 {dimension_numbers = #tpu.dot_dimension_numbers<[1], [0], [0], [1], [0, 0, 1, 1], [], []>} : vector<8x128xbf16>, vector<128x128xbf16>, vector<8x128xf32> -> vector<8x128xf32>
      %c0_34 = arith.constant 0 : index
      %c0_35 = arith.constant 0 : index
      %51 = vector.load %arg9[%c0_34, %c0_35] : memref<1x128xf32, #tpu.memory_space<vmem>>, vector<1x128xf32>
      %52 = vector.broadcast %51 : vector<1x128xf32> to vector<8x128xf32>
      %53 = arith.addf %50, %52 : vector<8x128xf32>
      %c0_36 = arith.constant 0 : index
      %c0_37 = arith.constant 0 : index
      %54 = vector.load %arg10[%c0_36, %c0_37] : memref<8x128xf32, #tpu.memory_space<vmem>>, vector<8x128xf32>
      tpu.vector_store %arg10[%c0_36, %c0_37], %53 {strides = array<i32>} : memref<8x128xf32, #tpu.memory_space<vmem>>, vector<8x128xf32>,
    } else {
    }
    return
  }
  func.func @transform_0(%arg0: i32, %arg1: i32) -> (i32, i32) {
    %c0_i32 = arith.constant 0 : i32
    %c0_i32_0 = arith.constant 0 : i32
    return %arg0, %c0_i32 : i32, i32
  }
  func.func @transform_1(%arg0: i32, %arg1: i32) -> (i32, i32) {
    %c0_i32 = arith.constant 0 : i32
    %c0_i32_0 = arith.constant 0 : i32
    return %arg1, %c0_i32 : i32, i32
  }
  func.func @transform_2(%arg0: i32, %arg1: i32) -> (i32, i32) {
    %c0_i32 = arith.constant 0 : i32
    %c0_i32_0 = arith.constant 0 : i32
    %c0_i32_1 = arith.constant 0 : i32
    return %c0_i32, %c0_i32_0 : i32, i32
  }
  func.func @transform_3(%arg0: i32, %arg1: i32) -> (i32, i32) {
    %c0_i32 = arith.constant 0 : i32
    %c0_i32_0 = arith.constant 0 : i32
    %c0_i32_1 = arith.constant 0 : i32
    return %c0_i32, %c0_i32_0 : i32, i32
  }
  func.func @transform_4(%arg0: i32, %arg1: i32) -> (i32, i32) {
    %c0_i32 = arith.constant 0 : i32
    %c0_i32_0 = arith.constant 0 : i32
    %c0_i32_1 = arith.constant 0 : i32
    return %c0_i32, %c0_i32_0 : i32, i32
  }
  func.func @transform_5(%arg0: i32, %arg1: i32) -> (i32, i32) {
    %c0_i32 = arith.constant 0 : i32
    %c0_i32_0 = arith.constant 0 : i32
    %c0_i32_1 = arith.constant 0 : i32
    return %c0_i32, %c0_i32_0 : i32, i32
  }
  func.func @transform_6(%arg0: i32, %arg1: i32) -> (i32, i32) {
    %c0_i32 = arith.constant 0 : i32
    %c0_i32_0 = arith.constant 0 : i32
    %c0_i32_1 = arith.constant 0 : i32
    return %c0_i32, %c0_i32_0 : i32, i32
  }
  func.func @transform_7(%arg0: i32, %arg1: i32) -> (i32, i32) {
    %c0_i32 = arith.constant 0 : i32
    %c0_i32_0 = arith.constant 0 : i32
    %c0_i32_1 = arith.constant 0 : i32
    return %c0_i32, %c0_i32_0 : i32, i32
  }
  func.func @transform_8(%arg0: i32, %arg1: i32) -> (i32, i32) {
    %c0_i32 = arith.constant 0 : i32
    %c0_i32_0 = arith.constant 0 : i32
    return %arg0, %c0_i32 : i32, i32
  }
}

</mosaic_0001>

<llo_original>
// kernel: tpu_custom_call.1
$region0: #{tpu_custom_call.1}
  #allocation0 [shape = 'u32[]', space=smem, size = 0x4, offset = 0x4, fixed_abs, tag = 'smem constant byte address 0x4 - core index']
  #allocation1 [shape = 'u32[72,128]{1,0:T(1,128)}', space=vmem, size = 0x9000, scoped, tag = 'internal scratch']
  #allocation2 [shape = 'bf16[8,128]{1,0:T(8,128)(2,1)}', space=vmem, size = 0x800, scoped, tag = 'scratch operand']
  #allocation3 [shape = 'f32[8,1]{1,0:T(8,128)}', space=vmem, size = 0x1000, scoped, tag = 'scratch operand']
  #allocation4 [shape = 'f32[8,1]{1,0:T(8,128)}', space=vmem, size = 0x1000, scoped, tag = 'scratch operand']
  #allocation5 [shape = 'f32[8,128]{1,0:T(8,128)}', space=vmem, size = 0x1000, scoped, tag = 'scratch operand']
  %s0 = inlined_call_operand.hbm [shape: bf16[8,128], index: 0, kind: input, shape index: {}]
  %s1 = inlined_call_operand.hbm [shape: bf16[8,128], index: 1, kind: input, shape index: {}]
  %s2 = inlined_call_operand.hbm [shape: bf16[128,128], index: 2, kind: input, shape index: {}]
  %s3 = inlined_call_operand.vmem [shape: f32[1,128], index: 3, kind: input, shape index: {}]
  %s4 = inlined_call_operand.hbm [shape: bf16[128,256], index: 4, kind: input, shape index: {}]
  %s5 = inlined_call_operand.vmem [shape: f32[1,256], index: 5, kind: input, shape index: {}]
  %s6 = inlined_call_operand.hbm [shape: bf16[128,128], index: 6, kind: input, shape index: {}]
  %s7 = inlined_call_operand.vmem [shape: f32[1,128], index: 7, kind: input, shape index: {}]
  %s8 = inlined_call_operand.hbm [shape: f32[8,128], index: 8, kind: output, shape index: {}]
  %s9 = sld [smem:[#allocation0]]
  $region70: #{tpu_custom_call.1} parent=0
    _
  %s11 = ssub.s32 1, %s9
  %s12 = scalar_select 0, %s11, %s9
  $region1: #{tpu_custom_call.1} parent=0
    #allocation6 [shape = 'u8[2048]{0}', space=vmem, size = 0x800, scoped, tag = 'input window, operand 0, single buffered']
    #allocation7 [shape = 's32[1]{0}', space=sflag, size = 0x4, scoped, tag = 'scoped memory for tpu_custom_call.1']
    #allocation8 [shape = 's32[1]{0}', space=sflag, size = 0x4, scoped, tag = 'scoped memory for tpu_custom_call.1']
    #allocation9 [shape = 'u8[2048]{0}', space=vmem, size = 0x800, scoped, tag = 'input window, operand 1, single buffered']
    #allocation10 [shape = 's32[1]{0}', space=sflag, size = 0x4, scoped, tag = 'scoped memory for tpu_custom_call.1']
    #allocation11 [shape = 'u8[32768]{0}', space=vmem, size = 0x8000, scoped, tag = 'input window, operand 2, single buffered']
    #allocation12 [shape = 'u8[65536]{0}', space=vmem, size = 0x10000, scoped, tag = 'input window, operand 4, single buffered']
    #allocation13 [shape = 's32[1]{0}', space=sflag, size = 0x4, scoped, tag = 'scoped memory for tpu_custom_call.1']
    #allocation14 [shape = 'u8[32768]{0}', space=vmem, size = 0x8000, scoped, tag = 'input window, operand 6, single buffered']
    #allocation15 [shape = 'u8[4096]{0}', space=vmem, size = 0x1000, scoped, tag = 'output window, operand 0, single buffered']
    %13 = vsyncpa [#allocation7], 0
    %14 = vsyncpa [#allocation10], 0
    %15 = vsyncpa [#allocation13], 0
    %16 = vsyncpa [#allocation8], 0
    // Predicated region
    $region2: #{tpu_custom_call.1} parent=1 // pred_check
      _
    $region3: #{tpu_custom_call.1} parent=1 // pred_check_branch
      %18 = sbr.rel (0) target = $region5
    $region4: #{tpu_custom_call.1} parent=1 // pred_region
      %20 = vsyncadd [#allocation7], 0
      %s22 = sshll.u32 %s0, 4
      %s23 = int_to_ptr.hbm [resolvable:$true] %s22
      %s24 = sshll.u32 [#allocation6], 4
      %s25 = int_to_ptr.vmem [resolvable:$true] %s24
      %27 = dma.hbm_to_vmem [thread:$0]  %s23, 64, %s25, [#allocation7]
    $region5: #{tpu_custom_call.1} parent=1 // pred_fallthru
      _
    // Predicated region
    $region6: #{tpu_custom_call.1} parent=1 // pred_check
      _
    $region7: #{tpu_custom_call.1} parent=1 // pred_check_branch
      %29 = sbr.rel (0) target = $region9
    $region8: #{tpu_custom_call.1} parent=1 // pred_region
      %31 = vsyncadd [#allocation10], 0
      %s33 = sshll.u32 %s1, 4
      %s34 = int_to_ptr.hbm [resolvable:$true] %s33
      %s35 = sshll.u32 [#allocation9], 4
      %s36 = int_to_ptr.vmem [resolvable:$true] %s35
      %38 = dma.hbm_to_vmem [thread:$0]  %s34, 64, %s36, [#allocation10]
    $region9: #{tpu_custom_call.1} parent=1 // pred_fallthru
      _
    // Predicated region
    $region10: #{tpu_custom_call.1} parent=1 // pred_check
      _
    $region11: #{tpu_custom_call.1} parent=1 // pred_check_branch
      %40 = sbr.rel (0) target = $region13
    $region12: #{tpu_custom_call.1} parent=1 // pred_region
      %42 = vsyncadd [#allocation10], 0
      %s43 = sshll.u32 %s2, 4
      %s44 = int_to_ptr.hbm [resolvable:$true] %s43
      %s45 = sshll.u32 [#allocation11], 4
      %s46 = int_to_ptr.vmem [resolvable:$true] %s45
      %51 = dma.hbm_to_vmem [thread:$0]  %s44, 1024, %s46, [#allocation10], 64, 64, 4
    $region13: #{tpu_custom_call.1} parent=1 // pred_fallthru
      _
    // Predicated region
    $region14: #{tpu_custom_call.1} parent=1 // pred_check
      _
    $region15: #{tpu_custom_call.1} parent=1 // pred_check_branch
      %53 = sbr.rel (0) target = $region17
    $region16: #{tpu_custom_call.1} parent=1 // pred_region
      _
    $region17: #{tpu_custom_call.1} parent=1 // pred_fallthru
      _
    // Predicated region
    $region18: #{tpu_custom_call.1} parent=1 // pred_check
      _
    $region19: #{tpu_custom_call.1} parent=1 // pred_check_branch
      %55 = sbr.rel (0) target = $region21
    $region20: #{tpu_custom_call.1} parent=1 // pred_region
      %57 = vsyncadd [#allocation13], 0
      %s58 = sshll.u32 %s4, 4
      %s59 = int_to_ptr.hbm [resolvable:$true] %s58
      %s60 = sshll.u32 [#allocation12], 4
      %s61 = int_to_ptr.vmem [resolvable:$true] %s60
      %66 = dma.hbm_to_vmem [thread:$0]  %s59, 2048, %s61, [#allocation13], 128, 128, 8
    $region21: #{tpu_custom_call.1} parent=1 // pred_fallthru
      _
    // Predicated region
    $region22: #{tpu_custom_call.1} parent=1 // pred_check
      _
    $region23: #{tpu_custom_call.1} parent=1 // pred_check_branch
      %68 = sbr.rel (0) target = $region25
    $region24: #{tpu_custom_call.1} parent=1 // pred_region
      _
    $region25: #{tpu_custom_call.1} parent=1 // pred_fallthru
      _
    // Predicated region
    $region26: #{tpu_custom_call.1} parent=1 // pred_check
      _
    $region27: #{tpu_custom_call.1} parent=1 // pred_check_branch
      %70 = sbr.rel (0) target = $region29
    $region28: #{tpu_custom_call.1} parent=1 // pred_region
      %72 = vsyncadd [#allocation13], 0
      %s73 = sshll.u32 %s6, 4
      %s74 = int_to_ptr.hbm [resolvable:$true] %s73
      %s75 = sshll.u32 [#allocation14], 4
      %s76 = int_to_ptr.vmem [resolvable:$true] %s75
      %81 = dma.hbm_to_vmem [thread:$0]  %s74, 1024, %s76, [#allocation13], 64, 64, 4
    $region29: #{tpu_custom_call.1} parent=1 // pred_fallthru
      _
    // Predicated region
    $region30: #{tpu_custom_call.1} parent=1 // pred_check
      _
    $region31: #{tpu_custom_call.1} parent=1 // pred_check_branch
      %83 = sbr.rel (0) target = $region33
    $region32: #{tpu_custom_call.1} parent=1 // pred_region
      _
    $region33: #{tpu_custom_call.1} parent=1 // pred_fallthru
      _
    // Predicated region
    $region34: #{tpu_custom_call.1} parent=1 // pred_check
      _
    $region35: #{tpu_custom_call.1} parent=1 // pred_check_branch
      %85 = sbr.rel (0) target = $region37
    $region36: #{tpu_custom_call.1} parent=1 // pred_region
      %87 = dma.done [#allocation7], 64
    $region37: #{tpu_custom_call.1} parent=1 // pred_fallthru
      _
    // Predicated region
    $region38: #{tpu_custom_call.1} parent=1 // pred_check
      _
    $region39: #{tpu_custom_call.1} parent=1 // pred_check_branch
      %89 = sbr.rel (0) target = $region41
    $region40: #{tpu_custom_call.1} parent=1 // pred_region
      %91 = dma.done [#allocation10], 64
    $region41: #{tpu_custom_call.1} parent=1 // pred_fallthru
      _
    // Predicated region
    $region42: #{tpu_custom_call.1} parent=1 // pred_check
      _
    $region43: #{tpu_custom_call.1} parent=1 // pred_check_branch
      %93 = sbr.rel (0) target = $region45
    $region44: #{tpu_custom_call.1} parent=1 // pred_region
      %95 = dma.done [#allocation10], 1024
    $region45: #{tpu_custom_call.1} parent=1 // pred_fallthru
      _
    // Predicated region
    $region46: #{tpu_custom_call.1} parent=1 // pred_check
      _
    $region47: #{tpu_custom_call.1} parent=1 // pred_check_branch
      %97 = sbr.rel (0) target = $region49
    $region48: #{tpu_custom_call.1} parent=1 // pred_region
      %99 = dma.done [#allocation13], 2048
    $region49: #{tpu_custom_call.1} parent=1 // pred_fallthru
      _
    // Predicated region
    $region50: #{tpu_custom_call.1} parent=1 // pred_check
      _
    $region51: #{tpu_custom_call.1} parent=1 // pred_check_branch
      %101 = sbr.rel (0) target = $region53
    $region52: #{tpu_custom_call.1} parent=1 // pred_region
      %103 = dma.done [#allocation13], 1024
    $region53: #{tpu_custom_call.1} parent=1 // pred_fallthru
      _
    %p105 = scmp.eq.s32.totalorder 0, 0
    // Predicated region
    $region54: #{tpu_custom_call.1} parent=1 // pred_check
      %p106 = pneg %p105
    $region55: #{tpu_custom_call.1} parent=1 // pred_check_branch
      %108 = sbr.rel (%p106) target = $region57
    $region56: #{tpu_custom_call.1} parent=1 // pred_region
      %v109 = vld [vmem:[#allocation6] sm:$0xf]
      %v110 = vld [vmem:[#allocation11] sm:$0xf]
      %v111 = vld [vmem:[#allocation11 + $0x4] sm:$0xf]
      %v112 = vld [vmem:[#allocation11 + $0x8] sm:$0xf]
      %v113 = vld [vmem:[#allocation11 + $0xc] sm:$0xf]
      %v114 = vld [vmem:[#allocation11 + $0x10] sm:$0xf]
      %v115 = vld [vmem:[#allocation11 + $0x14] sm:$0xf]
      %v116 = vld [vmem:[#allocation11 + $0x18] sm:$0xf]
      %v117 = vld [vmem:[#allocation11 + $0x1c] sm:$0xf]
      %v118 = vld [vmem:[#allocation11 + $0x20] sm:$0xf]
      %v119 = vld [vmem:[#allocation11 + $0x24] sm:$0xf]
      %v120 = vld [vmem:[#allocation11 + $0x28] sm:$0xf]
      %v121 = vld [vmem:[#allocation11 + $0x2c] sm:$0xf]
      %v122 = vld [vmem:[#allocation11 + $0x30] sm:$0xf]
      %v123 = vld [vmem:[#allocation11 + $0x34] sm:$0xf]
      %v124 = vld [vmem:[#allocation11 + $0x38] sm:$0xf]
      %v125 = vld [vmem:[#allocation11 + $0x3c] sm:$0xf]
      %v126 = vld [vmem:[%s3] sm:$0x1]
      %v128 = vperm.slane %v126, 0
      %v146 = vunpack.c.l.b16 %v110
      %v147 = vunpack.c.l.b16 %v111
      %v148 = vunpack.c.l.b16 %v112
      %v149 = vunpack.c.l.b16 %v113
      %v150 = vunpack.c.l.b16 %v114
      %v151 = vunpack.c.l.b16 %v115
      %v152 = vunpack.c.l.b16 %v116
      %v153 = vunpack.c.l.b16 %v117
      %v154 = vunpack.c.l.b16 %v118
      %v155 = vunpack.c.l.b16 %v119
      %v156 = vunpack.c.l.b16 %v120
      %v157 = vunpack.c.l.b16 %v121
      %v158 = vunpack.c.l.b16 %v122
      %v159 = vunpack.c.l.b16 %v123
      %v160 = vunpack.c.l.b16 %v124
      %v161 = vunpack.c.l.b16 %v125
      %v162 = vpack.c.b16 %v147, %v146
      %v163 = vpack.c.b16 %v149, %v148
      %v164 = vpack.c.b16 %v151, %v150
      %v165 = vpack.c.b16 %v153, %v152
      %v166 = vpack.c.b16 %v155, %v154
      %v167 = vpack.c.b16 %v157, %v156
      %v168 = vpack.c.b16 %v159, %v158
      %v169 = vpack.c.b16 %v161, %v160
      %178 = vmatpush.bf16.msra.mxu0 %v169
      %179 = vmatpush.bf16.msra.mxu0 %v168
      %180 = vmatpush.bf16.msra.mxu0 %v167
      %181 = vmatpush.bf16.msra.mxu0 %v166
      %182 = vmatpush.bf16.msra.mxu0 %v165
      %183 = vmatpush.bf16.msra.mxu0 %v164
      %184 = vmatpush.bf16.msra.mxu0 %v163
      %185 = vmatpush.bf16.msra.mxu0 %v162
      %186 = vmatmul.bf16.gmra.mxu0 %v109
      %v187 = vpop.f32.mrf.mxu0
      %v188 = vadd.f32 %v128, %v187
      %v189 = vpop.f32.mrf.mxu0
      %190 = vdwg.mxu0
      %v191 = vpack.c.bf16 %v188, %v188
      %192 = vst [vmem:[#allocation2] sm:$0xf] %v191
      %vm193 = vcmask 7168
      %194 = vst.msk [vmem:[#allocation3] sm:$0xff] %vm193, -inf
      %195 = vst.msk [vmem:[#allocation4] sm:$0xff] %vm193, 0.0
      %196 = vst [vmem:[#allocation5] sm:$0xff] 0.0
    $region57: #{tpu_custom_call.1} parent=1 // pred_fallthru
      _
    %v197 = vld [vmem:[#allocation9] sm:$0xf]
    %v198 = vld [vmem:[#allocation12] sm:$0xff]
    %v199 = vld [vmem:[#allocation12 + $0x8] sm:$0xff]
    %v200 = vld [vmem:[#allocation12 + $0x10] sm:$0xff]
    %v201 = vld [vmem:[#allocation12 + $0x18] sm:$0xff]
    %v202 = vld [vmem:[#allocation12 + $0x20] sm:$0xff]
    %v203 = vld [vmem:[#allocation12 + $0x28] sm:$0xff]
    %v204 = vld [vmem:[#allocation12 + $0x30] sm:$0xff]
    %v205 = vld [vmem:[#allocation12 + $0x38] sm:$0xff]
    %v206 = vld [vmem:[#allocation12 + $0x40] sm:$0xff]
    %v207 = vld [vmem:[#allocation12 + $0x48] sm:$0xff]
    %v208 = vld [vmem:[#allocation12 + $0x50] sm:$0xff]
    %v209 = vld [vmem:[#allocation12 + $0x58] sm:$0xff]
    %v210 = vld [vmem:[#allocation12 + $0x60] sm:$0xff]
    %v211 = vld [vmem:[#allocation12 + $0x68] sm:$0xff]
    %v212 = vld [vmem:[#allocation12 + $0x70] sm:$0xff]
    %v213 = vld [vmem:[#allocation12 + $0x78] sm:$0xff]
    %v214 = vld [vmem:[%s5] sm:$0x3]
    %v216 = vperm.slane %v214, 0
    %v217 = vperm.slane %v214, 1
    %v236 = vunpack.c.l.b16 %v198
    %v237 = vunpack.c.h.b16 %v198
    %v238 = vunpack.c.l.b16 %v199
    %v239 = vunpack.c.h.b16 %v199
    %v240 = vunpack.c.l.b16 %v200
    %v241 = vunpack.c.h.b16 %v200
    %v242 = vunpack.c.l.b16 %v201
    %v243 = vunpack.c.h.b16 %v201
    %v244 = vunpack.c.l.b16 %v202
    %v245 = vunpack.c.h.b16 %v202
    %v246 = vunpack.c.l.b16 %v203
    %v247 = vunpack.c.h.b16 %v203
    %v248 = vunpack.c.l.b16 %v204
    %v249 = vunpack.c.h.b16 %v204
    %v250 = vunpack.c.l.b16 %v205
    %v251 = vunpack.c.h.b16 %v205
    %v252 = vunpack.c.l.b16 %v206
    %v253 = vunpack.c.h.b16 %v206
    %v254 = vunpack.c.l.b16 %v207
    %v255 = vunpack.c.h.b16 %v207
    %v256 = vunpack.c.l.b16 %v208
    %v257 = vunpack.c.h.b16 %v208
    %v258 = vunpack.c.l.b16 %v209
    %v259 = vunpack.c.h.b16 %v209
    %v260 = vunpack.c.l.b16 %v210
    %v261 = vunpack.c.h.b16 %v210
    %v262 = vunpack.c.l.b16 %v211
    %v263 = vunpack.c.h.b16 %v211
    %v264 = vunpack.c.l.b16 %v212
    %v265 = vunpack.c.h.b16 %v212
    %v266 = vunpack.c.l.b16 %v213
    %v267 = vunpack.c.h.b16 %v213
    %v268 = vpack.c.b16 %v238, %v236
    %v269 = vpack.c.b16 %v239, %v237
    %v270 = vpack.c.b16 %v242, %v240
    %v271 = vpack.c.b16 %v243, %v241
    %v272 = vpack.c.b16 %v246, %v244
    %v273 = vpack.c.b16 %v247, %v245
    %v274 = vpack.c.b16 %v250, %v248
    %v275 = vpack.c.b16 %v251, %v249
    %v276 = vpack.c.b16 %v254, %v252
    %v277 = vpack.c.b16 %v255, %v253
    %v278 = vpack.c.b16 %v258, %v256
    %v279 = vpack.c.b16 %v259, %v257
    %v280 = vpack.c.b16 %v262, %v260
    %v281 = vpack.c.b16 %v263, %v261
    %v282 = vpack.c.b16 %v266, %v264
    %v283 = vpack.c.b16 %v267, %v265
    %300 = vmatpush.bf16.msra.mxu0 %v282
    %301 = vmatpush.bf16.msra.mxu0 %v280
    %302 = vmatpush.bf16.msra.mxu0 %v278
    %303 = vmatpush.bf16.msra.mxu0 %v276
    %304 = vmatpush.bf16.msra.mxu0 %v274
    %305 = vmatpush.bf16.msra.mxu0 %v272
    %306 = vmatpush.bf16.msra.mxu0 %v270
    %307 = vmatpush.bf16.msra.mxu0 %v268
    %308 = vmatmul.bf16.gmra.mxu0 %v197
    %v309 = vpop.f32.mrf.mxu0
    %v310 = vadd.f32 %v216, %v309
    %v311 = vpop.f32.mrf.mxu0
    %312 = vdwg.mxu0
    %313 = vmatpush.bf16.msra.mxu0 %v283
    %314 = vmatpush.bf16.msra.mxu0 %v281
    %315 = vmatpush.bf16.msra.mxu0 %v279
    %316 = vmatpush.bf16.msra.mxu0 %v277
    %317 = vmatpush.bf16.msra.mxu0 %v275
    %318 = vmatpush.bf16.msra.mxu0 %v273
    %319 = vmatpush.bf16.msra.mxu0 %v271
    %320 = vmatpush.bf16.msra.mxu0 %v269
    %321 = vmatmul.bf16.gmra.mxu0 %v197
    %v322 = vpop.f32.mrf.mxu0
    %v323 = vadd.f32 %v217, %v322
    %v324 = vpop.f32.mrf.mxu0
    %325 = vdwg.mxu0
    %v326 = vpack.c.bf16 %v310, %v310
    %v327 = vpack.c.bf16 %v323, %v323
    %v328 = vld [vmem:[#allocation2] sm:$0xf]
    %329 = vmatpush.bf16.xpose.msra.mxu0 0
    %330 = vmatpush.bf16.xpose.msra.mxu0 0
    %331 = vmatpush.bf16.xpose.msra.mxu0 0
    %332 = vmatpush.bf16.xpose.msra.mxu0 0
    %333 = vmatpush.bf16.xpose.msra.mxu0 0
    %334 = vmatpush.bf16.xpose.msra.mxu0 0
    %335 = vmatpush.bf16.xpose.msra.mxu0 0
    %336 = vmatpush.bf16.xpose.msra.mxu0 %v326
    %337 = vmatmul.bf16.gmra.mxu0 %v328
    %v338 = vpop.f32.mrf.mxu0
    %v339 = vadd.f32 0.0, %v338
    %v340 = vpop.f32.mrf.mxu0
    %341 = vdwg.mxu0
    %v342 = vmul.f32 %v339, 0.17677669
    %v343 = vld [vmem:[#allocation3] sm:$0xff]
    %vm344 = vcmask 64512
    %v345 = vsel %vm344, %v342, -inf
    %346 = vmax.xlane.f32.xlu0 %v345
    %v347 = vpop.xlane.xlu0 %346
    %v348 = vmax.f32 %v343, %v347
    %v349 = vsub.f32 %v343, %v348
    %v350 = vmul.f32 %v349, 1.442695
    %v351 = vpow.pop %v350
    %353 = vset.pattern.permute.xlu0 0
    %354 = vperm.xlu0 %353, %v348
    %v355 = vpop.permute.xlu0 %354
    %v357 = vsub.f32 %v342, %v355
    %v358 = vmul.f32 %v357, 1.442695
    %v359 = vpow.pop %v358
    %v360 = vld [vmem:[#allocation4] sm:$0xff]
    %v361 = vmul.f32 %v351, %v360
    %v362 = vsel %vm344, %v359, 0.0
    %363 = vadd.xlane.f32.xlu0 %v362
    %v364 = vpop.xlane.xlu0 %363
    %v365 = vadd.f32 %v361, %v364
    %vm366 = vcmask 7168
    %367 = vst.msk [vmem:[#allocation4] sm:$0xff] %vm366, %v365
    %v368 = vld [vmem:[#allocation5] sm:$0xff]
    %370 = vset.pattern.permute.xlu0 0
    %371 = vperm.xlu0 %370, %v351
    %v372 = vpop.permute.xlu0 %371
    %v374 = vmul.f32 %v372, %v368
    %v375 = vpack.c.bf16 %v359, %v359
    %v377 = vsel %vm344, %v375, 0
    %vm379 = vcmask 1043456
    %v381 = vsel %vm379, %v327, 0
    %383 = vmatpush.bf16.msra.mxu0 0
    %384 = vmatpush.bf16.msra.mxu0 0
    %385 = vmatpush.bf16.msra.mxu0 0
    %386 = vmatpush.bf16.msra.mxu0 0
    %387 = vmatpush.bf16.msra.mxu0 0
    %388 = vmatpush.bf16.msra.mxu0 0
    %389 = vmatpush.bf16.msra.mxu0 0
    %390 = vmatpush.bf16.msra.mxu0 %v381
    %391 = vmatmul.bf16.gmra.mxu0 %v377
    %v392 = vpop.f32.mrf.mxu0
    %v393 = vadd.f32 0.0, %v392
    %v394 = vpop.f32.mrf.mxu0
    %395 = vdwg.mxu0
    %v396 = vadd.f32 %v374, %v393
    %397 = vst [vmem:[#allocation5] sm:$0xff] %v396
    %398 = vst.msk [vmem:[#allocation3] sm:$0xff] %vm366, %v348
    // Predicated region
    $region58: #{tpu_custom_call.1} parent=1 // pred_check
      %p399 = pneg %p105
    $region59: #{tpu_custom_call.1} parent=1 // pred_check_branch
      %401 = sbr.rel (%p399) target = $region61
    $region60: #{tpu_custom_call.1} parent=1 // pred_region
      %v402 = vld [vmem:[#allocation5] sm:$0xff]
      %v403 = vld [vmem:[#allocation4] sm:$0xff]
      %v404 = vrcp.pop %v403
      %406 = vset.pattern.permute.xlu0 0
      %407 = vperm.xlu0 %406, %v404
      %v408 = vpop.permute.xlu0 %407
      %v410 = vmul.f32 %v402, %v408
      %v411 = vpack.c.bf16 %v410, %v410
      %v412 = vld [vmem:[#allocation14] sm:$0xf]
      %v413 = vld [vmem:[#allocation14 + $0x4] sm:$0xf]
      %v414 = vld [vmem:[#allocation14 + $0x8] sm:$0xf]
      %v415 = vld [vmem:[#allocation14 + $0xc] sm:$0xf]
      %v416 = vld [vmem:[#allocation14 + $0x10] sm:$0xf]
      %v417 = vld [vmem:[#allocation14 + $0x14] sm:$0xf]
      %v418 = vld [vmem:[#allocation14 + $0x18] sm:$0xf]
      %v419 = vld [vmem:[#allocation14 + $0x1c] sm:$0xf]
      %v420 = vld [vmem:[#allocation14 + $0x20] sm:$0xf]
      %v421 = vld [vmem:[#allocation14 + $0x24] sm:$0xf]
      %v422 = vld [vmem:[#allocation14 + $0x28] sm:$0xf]
      %v423 = vld [vmem:[#allocation14 + $0x2c] sm:$0xf]
      %v424 = vld [vmem:[#allocation14 + $0x30] sm:$0xf]
      %v425 = vld [vmem:[#allocation14 + $0x34] sm:$0xf]
      %v426 = vld [vmem:[#allocation14 + $0x38] sm:$0xf]
      %v427 = vld [vmem:[#allocation14 + $0x3c] sm:$0xf]
      %v428 = vld [vmem:[%s7] sm:$0x1]
      %v430 = vperm.slane %v428, 0
      %v448 = vunpack.c.l.b16 %v412
      %v449 = vunpack.c.l.b16 %v413
      %v450 = vunpack.c.l.b16 %v414
      %v451 = vunpack.c.l.b16 %v415
      %v452 = vunpack.c.l.b16 %v416
      %v453 = vunpack.c.l.b16 %v417
      %v454 = vunpack.c.l.b16 %v418
      %v455 = vunpack.c.l.b16 %v419
      %v456 = vunpack.c.l.b16 %v420
      %v457 = vunpack.c.l.b16 %v421
      %v458 = vunpack.c.l.b16 %v422
      %v459 = vunpack.c.l.b16 %v423
      %v460 = vunpack.c.l.b16 %v424
      %v461 = vunpack.c.l.b16 %v425
      %v462 = vunpack.c.l.b16 %v426
      %v463 = vunpack.c.l.b16 %v427
      %v464 = vpack.c.b16 %v449, %v448
      %v465 = vpack.c.b16 %v451, %v450
      %v466 = vpack.c.b16 %v453, %v452
      %v467 = vpack.c.b16 %v455, %v454
      %v468 = vpack.c.b16 %v457, %v456
      %v469 = vpack.c.b16 %v459, %v458
      %v470 = vpack.c.b16 %v461, %v460
      %v471 = vpack.c.b16 %v463, %v462
      %480 = vmatpush.bf16.msra.mxu0 %v471
      %481 = vmatpush.bf16.msra.mxu0 %v470
      %482 = vmatpush.bf16.msra.mxu0 %v469
      %483 = vmatpush.bf16.msra.mxu0 %v468
      %484 = vmatpush.bf16.msra.mxu0 %v467
      %485 = vmatpush.bf16.msra.mxu0 %v466
      %486 = vmatpush.bf16.msra.mxu0 %v465
      %487 = vmatpush.bf16.msra.mxu0 %v464
      %488 = vmatmul.bf16.gmra.mxu0 %v411
      %v489 = vpop.f32.mrf.mxu0
      %v490 = vadd.f32 %v430, %v489
      %v491 = vpop.f32.mrf.mxu0
      %492 = vdwg.mxu0
      %493 = vst [vmem:[#allocation15] sm:$0xff] %v490
    $region61: #{tpu_custom_call.1} parent=1 // pred_fallthru
      _
    // Predicated region
    $region62: #{tpu_custom_call.1} parent=1 // pred_check
      _
    $region63: #{tpu_custom_call.1} parent=1 // pred_check_branch
      %495 = sbr.rel (0) target = $region65
    $region64: #{tpu_custom_call.1} parent=1 // pred_region
      %497 = vsyncadd [#allocation8], 0
      %s499 = sshll.u32 [#allocation15], 4
      %s500 = int_to_ptr.vmem [resolvable:$true] %s499
      %s501 = sshll.u32 %s8, 4
      %s502 = int_to_ptr.hbm [resolvable:$true] %s501
      %504 = dma.vmem_to_hbm [thread:$0]  %s500, 128, %s502, [#allocation8]
    $region65: #{tpu_custom_call.1} parent=1 // pred_fallthru
      _
    // Predicated region
    $region66: #{tpu_custom_call.1} parent=1 // pred_check
      _
    $region67: #{tpu_custom_call.1} parent=1 // pred_check_branch
      %506 = sbr.rel (0) target = $region69
    $region68: #{tpu_custom_call.1} parent=1 // pred_region
      %508 = dma.done [#allocation8], 128
    $region69: #{tpu_custom_call.1} parent=1 // pred_fallthru
      _
    %509 = vsyncpa [#allocation7], 1
    %510 = vsyncpa [#allocation10], 1
    %511 = vsyncpa [#allocation13], 1
    %512 = vsyncpa [#allocation8], 1

</llo_original>
